<compile_context>
chip_gen: v7x
topology: tpu7x:2x2x1
jax: 0.10.0
libtpu: 0.0.40
codegen_flags: <defaults>
</compile_context>

<pallas_src>
import functools

import jax
import jax.numpy as jnp
from jax.experimental import pallas as pl
from jax.experimental.pallas import tpu as pltpu


# --------------------------------------------------------------------------- #
# Kernels
# --------------------------------------------------------------------------- #
def _sta_kernel(thr_ref, x_ref, w1t_ref, w2t_ref, o_ref, *, inv_hw):
    """One grid step: TB batch elements, full (C, HW) spatial slab each."""
    x = x_ref[...]                                             # (TB, C, HW) native dtype

    # Global average pool over the spatial (lane) axis; widen fused into the
    # reduction (no materialized f32 copy of the block). Ragged lane tail is
    # masked by Mosaic, so dividing by the true H*W is exact.
    y = jnp.sum(x, axis=-1, dtype=jnp.float32) * inv_hw        # (TB, C) f32

    # Tiny squeeze-excite FC, batched over TB (weights pre-transposed in wrapper).
    h = jnp.maximum(
        jnp.dot(y, w1t_ref[...], preferred_element_type=jnp.float32), 0.0)   # (TB, hid)
    y2 = jnp.dot(h, w2t_ref[...], preferred_element_type=jnp.float32)        # (TB, C)

    g = jax.nn.sigmoid(y2)                                     # (TB, C) f32
    thr = thr_ref[0]                                           # scalar threshold (SMEM)

    # 0/1 gate in the native dtype; one broadcast multiply per vreg, no zeros slab.
    gate = (g >= thr).astype(x.dtype)[:, :, None]              # (TB, C, 1)
    o_ref[...] = x * gate


def _gate_apply_kernel(gate_ref, x_ref, o_ref):
    """Fallback pass: apply a precomputed (1, C, 1) 0/1 gate to an x tile."""
    g = gate_ref[...].astype(o_ref.dtype)                      # (1, C, 1)
    o_ref[...] = x_ref[...] * g


# --------------------------------------------------------------------------- #
# Scheduling helpers
# --------------------------------------------------------------------------- #
def _detect_vmem_cap():
    try:
        return int(pltpu.get_tpu_info().vmem_capacity_bytes)
    except Exception:
        return 64 * 1024 * 1024      # v7x per-TC capacity: safe lower bound


def _batch_dim_semantic():
    """CORE_PARALLEL only when a multi-TensorCore chip (v7x) is positively detected."""
    try:
        info = pltpu.get_tpu_info()
        for attr in ("num_tensorcores", "tensorcores_per_chip",
                     "num_cores_per_chip", "cores_per_chip"):
            v = getattr(info, attr, None)
            if v is not None and int(v) >= 2:
                return pltpu.CORE_PARALLEL
    except Exception:
        pass
    return "parallel"


def _choose_block_batch(B, per_elem_bytes, vmem_budget_bytes):
    """Pick the batch tile TB.

    Targets ~0.5-4 MiB per buffer and >= 8 grid steps when B permits (>= 2
    otherwise), while keeping the double-buffered in+out blocks inside ~1/3 of
    the VMEM budget. Returns None when even TB=1 does not fit (caller falls
    back to the two-pass path)."""
    cap_by_vmem = (vmem_budget_bytes // 3) // (4 * per_elem_bytes)   # 2 bufs x (in+out)
    if cap_by_vmem < 1:
        return None
    target_lo = 512 * 1024
    target_hi = 4 * 1024 * 1024
    cands = [d for d in range(1, B + 1) if B % d == 0 and d <= cap_by_vmem]
    for steps_min, lo, hi in ((8, target_lo, target_hi),
                              (8, 0, target_hi),
                              (2, target_lo, target_hi),
                              (2, 0, target_hi),
                              (1, 0, target_hi)):
        sel = [d for d in cands
               if B // d >= steps_min and lo <= d * per_elem_bytes <= hi]
        if sel:
            return max(sel)
    return max(cands)   # nothing meets the targets; largest that fits VMEM


# --------------------------------------------------------------------------- #
# Wrapper
# --------------------------------------------------------------------------- #
def soft_threshold_attention_residual(x, w1, w2, threshold, *, vmem_cap_bytes=None):
    """x: (B, C, H, W) NCHW, any float dtype.
    w1: (C//r, C), w2: (C, C//r)  (PyTorch Linear weight layout).  threshold: (1,)."""
    B, C, H, W = x.shape
    HW = H * W
    hid = w1.shape[0]
    # The module's threshold parameter is a single scalar (torch.tensor([threshold])).
    assert threshold.size == 1, "kernel supports the module's scalar threshold only"

    xf = x.reshape(B, C, HW)                           # native dtype end to end
    itemsize = jnp.dtype(x.dtype).itemsize

    w1t = jnp.transpose(w1).astype(jnp.float32)        # (C, hid)
    w2t = jnp.transpose(w2).astype(jnp.float32)        # (hid, C)
    thr = jnp.reshape(threshold, (1,)).astype(jnp.float32)

    vmem_cap = int(vmem_cap_bytes) if vmem_cap_bytes is not None else _detect_vmem_cap()
    batch_sem = _batch_dim_semantic()

    bytes_accessed = 2 * B * C * HW * itemsize + (w1t.size + w2t.size) * 4
    flops = 4 * B * C * hid + B * C * HW
    cost = pl.CostEstimate(flops=flops, transcendentals=B * C,
                           bytes_accessed=bytes_accessed)

    per_elem = C * HW * itemsize
    tb = _choose_block_batch(B, per_elem, vmem_cap)

    if tb is not None:
        # ---- single-pass path: pool + FC + gate + store, one read / one write of x ----
        weights_bytes = (w1t.size + w2t.size) * 4
        vmem_limit = int(min(64 * 1024 * 1024,
                             max(16 * 1024 * 1024,
                                 4 * tb * per_elem + weights_bytes + (2 << 20))))

        kernel = functools.partial(_sta_kernel, inv_hw=1.0 / HW)
        out = pl.pallas_call(
            kernel,
            out_shape=jax.ShapeDtypeStruct((B, C, HW), x.dtype),
            grid_spec=pltpu.PrefetchScalarGridSpec(
                num_scalar_prefetch=1,                  # threshold scalar lives in SMEM
                grid=(B // tb,),
                in_specs=[
                    # last block dim == full HW: legal even when HW % 128 != 0,
                    # Mosaic masks the ragged lane tail (no wrapper pad/slice passes)
                    pl.BlockSpec((tb, C, HW), lambda b, thr_ref: (b, 0, 0)),
                    pl.BlockSpec(w1t.shape, lambda b, thr_ref: (0, 0)),   # W1^T resident
                    pl.BlockSpec(w2t.shape, lambda b, thr_ref: (0, 0)),   # W2^T resident
                ],
                out_specs=pl.BlockSpec((tb, C, HW), lambda b, thr_ref: (b, 0, 0)),
            ),
            compiler_params=pltpu.CompilerParams(
                dimension_semantics=(batch_sem,),
                vmem_limit_bytes=vmem_limit,
            ),
            cost_estimate=cost,
        )(thr, xf, w1t, w2t)
        return out.reshape(B, C, H, W)

    # ---- fallback path: a single (1, C, HW) slab does not fit the VMEM budget ----
    # Pass 1 (tiny, plain XLA): pooled vector -> FC -> sigmoid -> 0/1 gate per (b, c).
    y = jnp.mean(xf, axis=-1, dtype=jnp.float32)                       # (B, C)
    h = jnp.maximum(y @ w1t, 0.0)
    g = jax.nn.sigmoid(h @ w2t)
    gate = (g >= thr[0]).astype(jnp.float32).reshape(B, C, 1)          # (B, C, 1)

    # Pass 2 (Pallas): gate-apply, tiled freely over (batch, HW blocks).
    thw_cap = ((vmem_cap // 3) // (4 * C * itemsize)) // 128 * 128
    thw = max(128, min(thw_cap, (4 << 20) // max(1, C * itemsize) // 128 * 128))
    thw = min(thw, ((HW + 127) // 128) * 128)
    block_bytes = C * thw * itemsize
    vmem_limit = int(min(64 * 1024 * 1024,
                         max(16 * 1024 * 1024, 6 * block_bytes + (2 << 20))))
    grid = (B, pl.cdiv(HW, thw))

    out = pl.pallas_call(
        _gate_apply_kernel,
        out_shape=jax.ShapeDtypeStruct((B, C, HW), x.dtype),
        grid_spec=pltpu.PrefetchScalarGridSpec(
            num_scalar_prefetch=0,
            grid=grid,
            in_specs=[
                pl.BlockSpec((1, C, 1), lambda b, hh: (b, 0, 0)),      # gate row
                pl.BlockSpec((1, C, thw), lambda b, hh: (b, 0, hh)),   # x tile
            ],
            out_specs=pl.BlockSpec((1, C, thw), lambda b, hh: (b, 0, hh)),
        ),
        compiler_params=pltpu.CompilerParams(
            dimension_semantics=(batch_sem, "parallel"),
            vmem_limit_bytes=vmem_limit,
        ),
        cost_estimate=cost,
    )(gate, xf)
    # TODO(synk): for extreme channel counts (C*128*itemsize > VMEM budget) the
    # fallback would additionally need to tile the channel axis.
    return out.reshape(B, C, H, W)


# --------------------------------------------------------------------------- #
# Pure-JAX reference (live PyTorch path only)
# --------------------------------------------------------------------------- #
def _reference(x, w1, w2, threshold):
    y = jnp.mean(x.astype(jnp.float32), axis=(2, 3))           # (B, C) AdaptiveAvgPool2d(1)
    y = jnp.maximum(y @ w1.T, 0.0) @ w2.T                      # fc (no bias)
    y = jax.nn.sigmoid(y)[:, :, None, None]                    # (B, C, 1, 1)
    thr = threshold.reshape(1, -1, 1, 1)
    gate = jnp.where(y < thr, 0.0, 1.0).astype(x.dtype)
    return x * gate


if __name__ == "__main__":
    key = jax.random.PRNGKey(0)
    B, C, H, W = 2, 32, 16, 16
    reduction_ratio = 4                       # hidden = C // 4 = 8
    hid = C // reduction_ratio

    kx, k1, k2 = jax.random.split(key, 3)
    x = jax.random.normal(kx, (B, C, H, W), dtype=jnp.float32)
    # Deterministic synthetic weights (PyTorch Linear weight layout: (out, in)).
    w1 = jax.random.normal(k1, (hid, C), dtype=jnp.float32) * (1.0 / jnp.sqrt(C))
    w2 = jax.random.normal(k2, (C, hid), dtype=jnp.float32) * (1.0 / jnp.sqrt(hid))
    threshold = jnp.array([0.5], dtype=jnp.float32)

    # f32 path, HW a multiple of 128.
    out = jax.block_until_ready(soft_threshold_attention_residual(x, w1, w2, threshold))
    ref = _reference(x, w1, w2, threshold)
    assert out.shape == (B, C, H, W) and out.dtype == x.dtype
    assert jnp.allclose(out, ref, atol=1e-5, rtol=1e-5), "f32 mismatch vs reference"

    # Non-128-multiple spatial extent (H*W = 196) -> ragged lane tail masked in-kernel.
    x2 = jax.random.normal(kx, (B, C, 14, 14), dtype=jnp.float32)
    out2 = jax.block_until_ready(soft_threshold_attention_residual(x2, w1, w2, threshold))
    ref2 = _reference(x2, w1, w2, threshold)
    assert jnp.allclose(out2, ref2, atol=1e-5, rtol=1e-5), "ragged-HW mismatch vs reference"

    # Native bf16 I/O smoke test (no wrapper dtype round-trips; f32 accumulation in-kernel).
    xb = x.astype(jnp.bfloat16)
    outb = jax.block_until_ready(soft_threshold_attention_residual(xb, w1, w2, threshold))
    assert outb.shape == (B, C, H, W) and outb.dtype == jnp.bfloat16

    # Force the two-pass fallback (tiny fake VMEM budget) on both aligned and ragged HW.
    outf = jax.block_until_ready(
        soft_threshold_attention_residual(x, w1, w2, threshold, vmem_cap_bytes=64 * 1024))
    assert jnp.allclose(outf, ref, atol=1e-5, rtol=1e-5), "fallback mismatch vs reference"
    outf2 = jax.block_until_ready(
        soft_threshold_attention_residual(x2, w1, w2, threshold, vmem_cap_bytes=64 * 1024))
    assert jnp.allclose(outf2, ref2, atol=1e-5, rtol=1e-5), "fallback ragged mismatch"

    print("KERNEL_OK")
</pallas_src>

<mosaic_0001>
module attributes {stable_mosaic.version = 11 : i64} {
  func.func @_sta_kernel(%arg0: i32, %arg1: memref<1xf32, #tpu.memory_space<smem>>, %arg2: memref<1x32x256xf32, #tpu.memory_space<vmem>>, %arg3: memref<32x8xf32, #tpu.memory_space<vmem>>, %arg4: memref<8x32xf32, #tpu.memory_space<vmem>>, %arg5: memref<1x32x256xf32, #tpu.memory_space<vmem>>) attributes {dimension_semantics = [#tpu.dimension_semantics<parallel>], iteration_bounds = array<i64: 2>, scalar_prefetch = 1 : i64, scratch_operands = 0 : i64, tpu.core_type = #tpu.core_type<tc>, window_params = [{transform_indices = @transform_0, window_bounds = array<i64: 1, 32, 256>}, {pipeline_mode = #tpu.pipeline_mode<synchronous>, transform_indices = @transform_1, window_bounds = array<i64: 32, 8>}, {pipeline_mode = #tpu.pipeline_mode<synchronous>, transform_indices = @transform_2, window_bounds = array<i64: 8, 32>}, {transform_indices = @transform_3, window_bounds = array<i64: 1, 32, 256>}]} {
    %c0 = arith.constant 0 : index
    %c0_0 = arith.constant 0 : index
    %c0_1 = arith.constant 0 : index
    %0 = vector.load %arg2[%c0, %c0_0, %c0_1] : memref<1x32x256xf32, #tpu.memory_space<vmem>>, vector<1x32x256xf32>
    %cst = arith.constant dense<0.000000e+00> : vector<1x32xf32>
    %1 = vector.multi_reduction <add>, %0, %cst [2] : vector<1x32x256xf32> to vector<1x32xf32>
    %cst_2 = arith.constant 3.906250e-03 : f32
    %2 = vector.broadcast %cst_2 : f32 to vector<1x32xf32>
    %3 = arith.mulf %1, %2 : vector<1x32xf32>
    %c0_3 = arith.constant 0 : index
    %c0_4 = arith.constant 0 : index
    %4 = vector.load %arg3[%c0_3, %c0_4] : memref<32x8xf32, #tpu.memory_space<vmem>>, vector<32x8xf32>
    %cst_5 = arith.constant dense<0.000000e+00> : vector<1x8xf32>
    %5 = tpu.matmul %3, %4, %cst_5 {dimension_numbers = #tpu.dot_dimension_numbers<[1], [0], [0], [1], [0, 0, 1, 1], [], []>} : vector<1x32xf32>, vector<32x8xf32>, vector<1x8xf32> -> vector<1x8xf32>
    %cst_6 = arith.constant 0.000000e+00 : f32
    %6 = vector.broadcast %cst_6 : f32 to vector<1x8xf32>
    %7 = arith.maximumf %5, %6 : vector<1x8xf32>
    %c0_7 = arith.constant 0 : index
    %c0_8 = arith.constant 0 : index
    %8 = vector.load %arg4[%c0_7, %c0_8] : memref<8x32xf32, #tpu.memory_space<vmem>>, vector<8x32xf32>
    %cst_9 = arith.constant dense<0.000000e+00> : vector<1x32xf32>
    %9 = tpu.matmul %7, %8, %cst_9 {dimension_numbers = #tpu.dot_dimension_numbers<[1], [0], [0], [1], [0, 0, 1, 1], [], []>} : vector<1x8xf32>, vector<8x32xf32>, vector<1x32xf32> -> vector<1x32xf32>
    %10 = arith.negf %9 : vector<1x32xf32>
    %11 = math.exp %10 : vector<1x32xf32>
    %cst_10 = arith.constant 1.000000e+00 : f32
    %12 = vector.broadcast %cst_10 : f32 to vector<1x32xf32>
    %13 = arith.addf %12, %11 : vector<1x32xf32>
    %14 = arith.divf %12, %13 : vector<1x32xf32>
    %c0_11 = arith.constant 0 : index
    %15 = memref.load %arg1[%c0_11] : memref<1xf32, #tpu.memory_space<smem>>
    %16 = vector.broadcast %15 : f32 to vector<1x32xf32>
    %17 = arith.cmpf oge, %14, %16 : vector<1x32xf32>
    %18 = arith.extui %17 : vector<1x32xi1> to vector<1x32xi32>
    %19 = arith.sitofp %18 : vector<1x32xi32> to vector<1x32xf32>
    %20 = vector.shape_cast %19 : vector<1x32xf32> to vector<1x32x1xf32>
    %21 = vector.broadcast %20 : vector<1x32x1xf32> to vector<1x32x256xf32>
    %22 = arith.mulf %0, %21 : vector<1x32x256xf32>
    %c0_12 = arith.constant 0 : index
    %c0_13 = arith.constant 0 : index
    %c0_14 = arith.constant 0 : index
    %23 = vector.load %arg5[%c0_12, %c0_13, %c0_14] : memref<1x32x256xf32, #tpu.memory_space<vmem>>, vector<1x32x256xf32>
    tpu.vector_store %arg5[%c0_12, %c0_13, %c0_14], %22 {strides = array<i32>} : memref<1x32x256xf32, #tpu.memory_space<vmem>>, vector<1x32x256xf32>,
    return
  }
  func.func @transform_0(%arg0: i32, %arg1: memref<1xf32, #tpu.memory_space<smem>>) -> (i32, i32, i32) {
    %c0_i32 = arith.constant 0 : i32
    %c0_i32_0 = arith.constant 0 : i32
    %c0_i32_1 = arith.constant 0 : i32
    return %arg0, %c0_i32, %c0_i32_0 : i32, i32, i32
  }
  func.func @transform_1(%arg0: i32, %arg1: memref<1xf32, #tpu.memory_space<smem>>) -> (i32, i32) {
    %c0_i32 = arith.constant 0 : i32
    %c0_i32_0 = arith.constant 0 : i32
    %c0_i32_1 = arith.constant 0 : i32
    return %c0_i32, %c0_i32_0 : i32, i32
  }
  func.func @transform_2(%arg0: i32, %arg1: memref<1xf32, #tpu.memory_space<smem>>) -> (i32, i32) {
    %c0_i32 = arith.constant 0 : i32
    %c0_i32_0 = arith.constant 0 : i32
    %c0_i32_1 = arith.constant 0 : i32
    return %c0_i32, %c0_i32_0 : i32, i32
  }
  func.func @transform_3(%arg0: i32, %arg1: memref<1xf32, #tpu.memory_space<smem>>) -> (i32, i32, i32) {
    %c0_i32 = arith.constant 0 : i32
    %c0_i32_0 = arith.constant 0 : i32
    %c0_i32_1 = arith.constant 0 : i32
    return %arg0, %c0_i32, %c0_i32_0 : i32, i32, i32
  }
}

</mosaic_0001>

<llo_original>
// kernel: tpu_custom_call.1
$region0: #{tpu_custom_call.1}
  #allocation0 [shape = 'u32[]', space=smem, size = 0x4, offset = 0x4, fixed_abs, tag = 'smem constant byte address 0x4 - core index']
  #allocation1 [shape = 'u32[144,128]{1,0:T(1,128)}', space=vmem, size = 0x12000, scoped, tag = 'internal scratch']
  #allocation2 [shape = 's32[1]{0}', space=sflag, size = 0x4, scoped, tag = 'scoped memory for tpu_custom_call.1']
  #allocation3 [shape = 'f32[1]{0:T(128)S(6)}', space=smem, size = 0x200, scoped, tag = 'prefetched SMEM operand 0']
  %s0 = inlined_call_operand.<no memory space> [shape: f32[1], index: 0, kind: input, shape index: {}]
  %s1 = inlined_call_operand.hbm [shape: f32[2,32,256], index: 1, kind: input, shape index: {}]
  %s2 = inlined_call_operand.vmem [shape: f32[32,8], index: 2, kind: input, shape index: {}]
  %s3 = inlined_call_operand.vmem [shape: f32[8,32], index: 3, kind: input, shape index: {}]
  %s4 = inlined_call_operand.hbm [shape: f32[2,32,256], index: 4, kind: output, shape index: {}]
  %s5 = sld [smem:[#allocation0]]
  $region49: #{tpu_custom_call.1} parent=0
    _
  %s7 = ssub.s32 1, %s5
  %s8 = scalar_select 0, %s7, %s5
  %9 = sst [smem:[#allocation3]] %s0
  $region1: #{tpu_custom_call.1} parent=0
    #allocation4 [shape = 'u8[65536]{0}', space=vmem, size = 0x10000, scoped, tag = 'input window, operand 1']
    #allocation5 [shape = 's32[2]{0}', space=sflag, size = 0x8, scoped, tag = 'scoped memory for tpu_custom_call.1']
    #allocation6 [shape = 's32[2]{0}', space=sflag, size = 0x8, scoped, tag = 'scoped memory for tpu_custom_call.1']
    #allocation7 [shape = 'u8[65536]{0}', space=vmem, size = 0x10000, scoped, tag = 'output window, operand 0']
    %10 = vsyncpa [#allocation5], 0
    %s11 = scalar_lea.sflag [#allocation5], 1
    %12 = vsyncpa %s11, 0
    %13 = vsyncpa [#allocation6], 0
    %s14 = scalar_lea.sflag [#allocation6], 1
    %15 = vsyncpa %s14, 0
    loop: start=0, step=1, limit=4
    $region2: #{tpu_custom_call.1} parent=1 // loop_pre_header
      _
    $region3: #{tpu_custom_call.1} parent=1 // loop_header
      %s17 = sphi 0, %s21
      %p18 = scmp.ge.s32.totalorder %s17, 4
      %s27 = sphi 0, %s29
      %s30 = sphi 0, %s27
      %s31 = sphi 0, %s30
      %s47 = sphi 0, %s31
      %s51 = sphi 0, %s51
      %s53 = sphi 0, %s51
      %s54 = sphi 0, %s53
      %s68 = sphi 0, %s54
      %s72 = sphi 0, %s72
      %s74 = sphi 0, %s72
      %s75 = sphi 0, %s74
      %s89 = sphi 0, %s75
      %s95 = sphi 0, %s97
      %s98 = sphi 0, %s95
      %s99 = sphi 0, %s98
      %s115 = sphi 0, %s99
    $region4: #{tpu_custom_call.1} parent=1 // loop_header_branch
      %20 = sbr.rel (%p18) target = $region8
    $region5: #{tpu_custom_call.1} parent=1 // loop_body
      %s22 = ssub.s32 %s17, 1
      %s23 = ssub.s32 %s17, 2
      %s24 = sadd.s32 %s17, 1
      %s25 = ssub.s32 %s17, %s24
      %p26 = scmp.eq.s32.totalorder %s25, 0
      %s28 = sadd.s32 %s27, 1
      %s29 = scalar_select %p26, %s27, %s28
      %p32 = pneg %p26
      %p33 = scmp.eq.s32.totalorder %s17, 1
      %p34 = por %p32, %p33
      %p35 = scmp.ne.s32.totalorder %s27, %s30
      %p36 = scmp.eq.s32.totalorder %s17, 0
      %p37 = por %p35, %p36
      %p38 = scmp.ne.s32.totalorder %s27, %s30
      %p39 = scmp.eq.s32.totalorder %s22, 1
      %p40 = por %p38, %p39
      %p41 = scmp.ne.s32.totalorder %s30, %s31
      %p42 = scmp.eq.s32.totalorder %s22, 0
      %p43 = por %p41, %p42
      %p44 = scmp.ne.s32.totalorder %s30, %s31
      %p45 = scmp.eq.s32.totalorder %s23, 1
      %p46 = por %p44, %p45
      %p48 = scmp.ne.s32.totalorder %s31, %s47
      %p49 = scmp.eq.s32.totalorder %s23, 0
      %p50 = por %p48, %p49
      %s52 = sadd.s32 %s51, 1
      %p55 = scmp.eq.s32.totalorder %s17, 1
      %p56 = scmp.ne.s32.totalorder %s51, %s53
      %p57 = scmp.eq.s32.totalorder %s17, 0
      %p58 = por %p56, %p57
      %p59 = scmp.ne.s32.totalorder %s51, %s53
      %p60 = scmp.eq.s32.totalorder %s22, 1
      %p61 = por %p59, %p60
      %p62 = scmp.ne.s32.totalorder %s53, %s54
      %p63 = scmp.eq.s32.totalorder %s22, 0
      %p64 = por %p62, %p63
      %p65 = scmp.ne.s32.totalorder %s53, %s54
      %p66 = scmp.eq.s32.totalorder %s23, 1
      %p67 = por %p65, %p66
      %p69 = scmp.ne.s32.totalorder %s54, %s68
      %p70 = scmp.eq.s32.totalorder %s23, 0
      %p71 = por %p69, %p70
      %s73 = sadd.s32 %s72, 1
      %p76 = scmp.eq.s32.totalorder %s17, 1
      %p77 = scmp.ne.s32.totalorder %s72, %s74
      %p78 = scmp.eq.s32.totalorder %s17, 0
      %p79 = por %p77, %p78
      %p80 = scmp.ne.s32.totalorder %s72, %s74
      %p81 = scmp.eq.s32.totalorder %s22, 1
      %p82 = por %p80, %p81
      %p83 = scmp.ne.s32.totalorder %s74, %s75
      %p84 = scmp.eq.s32.totalorder %s22, 0
      %p85 = por %p83, %p84
      %p86 = scmp.ne.s32.totalorder %s74, %s75
      %p87 = scmp.eq.s32.totalorder %s23, 1
      %p88 = por %p86, %p87
      %p90 = scmp.ne.s32.totalorder %s75, %s89
      %p91 = scmp.eq.s32.totalorder %s23, 0
      %p92 = por %p90, %p91
      %s93 = ssub.s32 %s17, %s24
      %p94 = scmp.eq.s32.totalorder %s93, 0
      %s96 = sadd.s32 %s95, 1
      %s97 = scalar_select %p94, %s95, %s96
      %p100 = pneg %p94
      %p101 = scmp.eq.s32.totalorder %s17, 1
      %p102 = por %p100, %p101
      %p103 = scmp.ne.s32.totalorder %s95, %s98
      %p104 = scmp.eq.s32.totalorder %s17, 0
      %p105 = por %p103, %p104
      %p106 = scmp.ne.s32.totalorder %s95, %s98
      %p107 = scmp.eq.s32.totalorder %s22, 1
      %p108 = por %p106, %p107
      %p109 = scmp.ne.s32.totalorder %s98, %s99
      %p110 = scmp.eq.s32.totalorder %s22, 0
      %p111 = por %p109, %p110
      %p112 = scmp.ne.s32.totalorder %s98, %s99
      %p113 = scmp.eq.s32.totalorder %s23, 1
      %p114 = por %p112, %p113
      %p116 = scmp.ne.s32.totalorder %s99, %s115
      %p117 = scmp.eq.s32.totalorder %s23, 0
      %p118 = por %p116, %p117
      %p119 = scmp.le.s32.totalorder 1, %s17
      %p120 = scmp.lt.s32.totalorder %s17, 3
      %p121 = pnand %p119, %p120
      %p122 = pneg %p121
      // Predicated region
      $region9: #{tpu_custom_call.1} parent=5 // pred_check
        _
      $region10: #{tpu_custom_call.1} parent=5 // pred_check_branch
        %124 = sbr.rel (%p121) target = $region12
      $region11: #{tpu_custom_call.1} parent=5 // pred_region
        %s125 = ssub.s32 %s17, 1
        // Predicated region
        $region13: #{tpu_custom_call.1} parent=11 // pred_check
          %p126 = pneg %p64
        $region14: #{tpu_custom_call.1} parent=11 // pred_check_branch
          %128 = sbr.rel (%p126) target = $region16
        $region15: #{tpu_custom_call.1} parent=11 // pred_region
          _
        $region16: #{tpu_custom_call.1} parent=11 // pred_fallthru
          _
        // Predicated region
        $region17: #{tpu_custom_call.1} parent=11 // pred_check
          %p129 = pneg %p85
        $region18: #{tpu_custom_call.1} parent=11 // pred_check_branch
          %131 = sbr.rel (%p129) target = $region20
        $region19: #{tpu_custom_call.1} parent=11 // pred_region
          _
        $region20: #{tpu_custom_call.1} parent=11 // pred_fallthru
          _
      $region12: #{tpu_custom_call.1} parent=5 // pred_fallthru
        _
      %p132 = scmp.lt.s32.totalorder %s17, 2
      // Predicated region
      $region21: #{tpu_custom_call.1} parent=5 // pred_check
        %p133 = pneg %p132
      $region22: #{tpu_custom_call.1} parent=5 // pred_check_branch
        %135 = sbr.rel (%p133) target = $region24
      $region23: #{tpu_custom_call.1} parent=5 // pred_region
        // Predicated region
        $region25: #{tpu_custom_call.1} parent=23 // pred_check
          %p136 = pneg %p37
        $region26: #{tpu_custom_call.1} parent=23 // pred_check_branch
          %138 = sbr.rel (%p136) target = $region28
        $region27: #{tpu_custom_call.1} parent=23 // pred_region
          %s139 = sand.u32 %s27, 1
          %s140 = scalar_lea.sflag [#allocation5], %s139
          %s141 = sand.u32 %s27, 1
          %s142 = smul.addr %s141, 64
          %s143 = scalar_lea.vmem [#allocation4], %s142
          %s145 = ssub.s32 1024, 1024
          %146 = vsyncadd %s140, %s145
          %s147 = smul.addr %s17, 8
          %s148 = smul.addr %s147, 128
          %s149 = scalar_lea.hbm %s1, %s148
          %s150 = sshll.u32 %s143, 4
          %s151 = int_to_ptr.vmem [resolvable:$true] %s150
          %156 = dma.hbm_to_vmem [thread:$0]  %s149, 1024, %s151, %s140, 256, 256, 16
        $region28: #{tpu_custom_call.1} parent=23 // pred_fallthru
          _
      $region24: #{tpu_custom_call.1} parent=5 // pred_fallthru
        _
      %p157 = scmp.le.s32.totalorder 1, %s17
      %p158 = scmp.lt.s32.totalorder %s17, 3
      %p159 = pnand %p157, %p158
      %p160 = pneg %p159
      // Predicated region
      $region29: #{tpu_custom_call.1} parent=5 // pred_check
        _
      $region30: #{tpu_custom_call.1} parent=5 // pred_check_branch
        %162 = sbr.rel (%p159) target = $region32
      $region31: #{tpu_custom_call.1} parent=5 // pred_region
        %s163 = ssub.s32 %s17, 1
        %s164 = sand.u32 %s30, 1
        %s165 = scalar_lea.sflag [#allocation5], %s164
        %s166 = sand.u32 %s30, 1
        %s167 = smul.addr %s166, 64
        %s168 = scalar_lea.vmem [#allocation4], %s167
        // Predicated region
        $region33: #{tpu_custom_call.1} parent=31 // pred_check
          %p169 = pneg %p43
        $region34: #{tpu_custom_call.1} parent=31 // pred_check_branch
          %171 = sbr.rel (%p169) target = $region36
        $region35: #{tpu_custom_call.1} parent=31 // pred_region
          %172 = dma.done %s165, 1024
        $region36: #{tpu_custom_call.1} parent=31 // pred_fallthru
          _
        %s173 = sand.u32 %s30, 1
        %s174 = scalar_lea.sflag [#allocation5], %s173
        %s175 = sand.u32 %s30, 1
        %s176 = smul.addr %s175, 64
        %s177 = scalar_lea.vmem [#allocation4], %s176
        %p178 = pneg %p43
        %p179 = pneg %p40
        %p180 = pneg %p64
        %p181 = pneg %p61
        %p182 = pneg %p85
        %p183 = pneg %p82
        %p184 = pneg %p111
        %p185 = pneg %p108
        %s186 = sand.u32 %s98, 1
        %s187 = scalar_lea.sflag [#allocation6], %s186
        %s188 = sand.u32 %s98, 1
        %s189 = smul.addr %s188, 64
        %s190 = scalar_lea.vmem [#allocation7], %s189
        %v191 = vld [vmem:[%s168] sm:$0xff]
        %v192 = vld [vmem:[%s168 + $0x8] sm:$0xff]
        %v193 = vld [vmem:[%s168 + $0x10] sm:$0xff]
        %v194 = vld [vmem:[%s168 + $0x18] sm:$0xff]
        %v195 = vld [vmem:[%s168 + $0x20] sm:$0xff]
        %v196 = vld [vmem:[%s168 + $0x28] sm:$0xff]
        %v197 = vld [vmem:[%s168 + $0x30] sm:$0xff]
        %v198 = vld [vmem:[%s168 + $0x38] sm:$0xff]
        %v199 = vadd.f32 %v191, %v192
        %200 = vadd.xlane.f32.xlu0 %v199
        %v201 = vpop.xlane.xlu0 %200
        %v202 = vadd.f32 %v193, %v194
        %203 = vadd.xlane.f32.xlu0 %v202
        %v204 = vpop.xlane.xlu0 %203
        %v205 = vadd.f32 %v195, %v196
        %206 = vadd.xlane.f32.xlu0 %v205
        %v207 = vpop.xlane.xlu0 %206
        %v208 = vadd.f32 %v197, %v198
        %209 = vadd.xlane.f32.xlu0 %v208
        %v210 = vpop.xlane.xlu0 %209
        %v211 = vmul.f32 %v201, 0.00390625
        %v212 = vmul.f32 %v204, 0.00390625
        %v213 = vmul.f32 %v207, 0.00390625
        %v214 = vmul.f32 %v210, 0.00390625
        %v215 = vld [vmem:[%s2] sm:$0xff]
        %v216 = vld [vmem:[%s2 + $0x8] sm:$0xff]
        %v217 = vld [vmem:[%s2 + $0x10] sm:$0xff]
        %v218 = vld [vmem:[%s2 + $0x18] sm:$0xff]
        %v223 = vlaneseq
        %v224 = vand.u32 %v223, 127
        %v225 = vlaneseq
        %v226 = vshrl.u32 %v225, 7
        %v227 = vsub.s32 %v224, %v226
        %v228 = vrot.slane %v211, %v227
        %v229 = vadd.s32 %v224, 4294967288
        %v230 = vlaneseq
        %v231 = vshrl.u32 %v230, 7
        %v232 = vsub.s32 %v229, %v231
        %v233 = vrot.slane %v212, %v232
        %vm234 = vcmask 130112
        %v235 = vsel %vm234, %v233, %v228
        %v236 = vadd.s32 %v224, 4294967280
        %v237 = vlaneseq
        %v238 = vshrl.u32 %v237, 7
        %v239 = vsub.s32 %v236, %v238
        %v240 = vrot.slane %v213, %v239
        %vm241 = vcmask 195712
        %v242 = vsel %vm241, %v240, %v235
        %v243 = vadd.s32 %v224, 4294967272
        %v244 = vlaneseq
        %v245 = vshrl.u32 %v244, 7
        %v246 = vsub.s32 %v243, %v245
        %v247 = vrot.slane %v214, %v246
        %vm248 = vcmask 261312
        %v249 = vsel %vm248, %v247, %v242
        %vm250 = vcmask 261120
        %v251 = vsel %vm250, %v249, 0
        %253 = vmatprep.subr.mxu0 0.0
        %254 = vmatpush1.msra.mxu0 %v215
        %255 = vmatprep.subr.mxu0 0.0
        %256 = vmatpush1.msra.mxu0 %v216
        %257 = vmatprep.subr.mxu0 0.0
        %258 = vmatpush1.msra.mxu0 %v217
        %259 = vmatprep.subr.mxu0 0.0
        %260 = vmatpush1.msra.mxu0 %v218
        %261 = vmatprep.subr.mxu0 0.0
        %262 = vmatpush1.msra.mxu0 0.0
        %263 = vmatprep.subr.mxu0 0.0
        %264 = vmatpush1.msra.mxu0 0.0
        %265 = vmatprep.subr.mxu0 0.0
        %266 = vmatpush1.msra.mxu0 0.0
        %267 = vmatprep.subr.mxu0 0.0
        %268 = vmatpush1.msra.mxu0 0.0
        %269 = vmatprep.subr.mxu0 0.0
        %270 = vmatpush1.msra.mxu0 0.0
        %271 = vmatprep.subr.mxu0 0.0
        %272 = vmatpush1.msra.mxu0 0.0
        %273 = vmatprep.subr.mxu0 0.0
        %274 = vmatpush1.msra.mxu0 0.0
        %275 = vmatprep.subr.mxu0 0.0
        %276 = vmatpush1.msra.mxu0 0.0
        %277 = vmatprep.subr.mxu0 0.0
        %278 = vmatpush1.msra.mxu0 0.0
        %279 = vmatprep.subr.mxu0 0.0
        %280 = vmatpush1.msra.mxu0 0.0
        %281 = vmatprep.subr.mxu0 0.0
        %282 = vmatpush1.msra.mxu0 0.0
        %283 = vmatprep.subr.mxu0 0.0
        %284 = vmatpush1.msra.mxu0 0.0
        %285 = vmatprep.subr.mxu0 0.0
        %286 = vmatpush1.msra.mxu0 0.0
        %287 = vmatprep.subr.mxu0 0.0
        %288 = vmatpush1.msra.mxu0 0.0
        %289 = vmatprep.subr.mxu0 0.0
        %290 = vmatpush1.msra.mxu0 0.0
        %291 = vmatprep.subr.mxu0 0.0
        %292 = vmatpush1.msra.mxu0 0.0
        %293 = vmatprep.subr.mxu0 0.0
        %294 = vmatpush1.msra.mxu0 0.0
        %295 = vmatprep.subr.mxu0 0.0
        %296 = vmatpush1.msra.mxu0 0.0
        %297 = vmatprep.subr.mxu0 0.0
        %298 = vmatpush1.msra.mxu0 0.0
        %299 = vmatprep.subr.mxu0 0.0
        %300 = vmatpush1.msra.mxu0 0.0
        %301 = vmatprep.subr.mxu0 0.0
        %302 = vmatpush1.msra.mxu0 0.0
        %303 = vmatprep.subr.mxu0 0.0
        %304 = vmatpush1.msra.mxu0 0.0
        %305 = vmatprep.subr.mxu0 0.0
        %306 = vmatpush1.msra.mxu0 0.0
        %307 = vmatprep.subr.mxu0 0.0
        %308 = vmatpush1.msra.mxu0 0.0
        %309 = vmatprep.subr.mxu0 0.0
        %310 = vmatpush1.msra.mxu0 0.0
        %311 = vmatprep.subr.mxu0 0.0
        %312 = vmatpush1.msra.mxu0 0.0
        %313 = vmatprep.subr.mxu0 0.0
        %314 = vmatpush1.msra.mxu0 0.0
        %315 = vmatprep.subr.mxu0 0.0
        %316 = vmatpush1.msra.mxu0 0.0
        %317 = vmatprep.mubr.f32.mxu0 0.0
        %318 = vmatmul.mubr.f32.gmra.mrb[0].mxu0 %v251
        %v319 = vpop.f32.mrb[0].mxu0
        %v320 = vadd.f32 0.0, %v319
        %v321 = vpop.f32.mrb[0].mxu0
        %322 = vdwg.mxu0
        %v323 = vmax.f32 %v320, 0.0
        %v324 = vld [vmem:[%s3] sm:$0xff]
        %vm325 = vcmask 64512
        %v327 = vsel %vm325, %v323, 0
        %329 = vmatprep.subr.mxu0 0.0
        %330 = vmatpush1.msra.mxu0 %v324
        %331 = vmatprep.subr.mxu0 0.0
        %332 = vmatpush1.msra.mxu0 0.0
        %333 = vmatprep.subr.mxu0 0.0
        %334 = vmatpush1.msra.mxu0 0.0
        %335 = vmatprep.subr.mxu0 0.0
        %336 = vmatpush1.msra.mxu0 0.0
        %337 = vmatprep.subr.mxu0 0.0
        %338 = vmatpush1.msra.mxu0 0.0
        %339 = vmatprep.subr.mxu0 0.0
        %340 = vmatpush1.msra.mxu0 0.0
        %341 = vmatprep.subr.mxu0 0.0
        %342 = vmatpush1.msra.mxu0 0.0
        %343 = vmatprep.subr.mxu0 0.0
        %344 = vmatpush1.msra.mxu0 0.0
        %345 = vmatprep.subr.mxu0 0.0
        %346 = vmatpush1.msra.mxu0 0.0
        %347 = vmatprep.subr.mxu0 0.0
        %348 = vmatpush1.msra.mxu0 0.0
        %349 = vmatprep.subr.mxu0 0.0
        %350 = vmatpush1.msra.mxu0 0.0
        %351 = vmatprep.subr.mxu0 0.0
        %352 = vmatpush1.msra.mxu0 0.0
        %353 = vmatprep.subr.mxu0 0.0
        %354 = vmatpush1.msra.mxu0 0.0
        %355 = vmatprep.subr.mxu0 0.0
        %356 = vmatpush1.msra.mxu0 0.0
        %357 = vmatprep.subr.mxu0 0.0
        %358 = vmatpush1.msra.mxu0 0.0
        %359 = vmatprep.subr.mxu0 0.0
        %360 = vmatpush1.msra.mxu0 0.0
        %361 = vmatprep.subr.mxu0 0.0
        %362 = vmatpush1.msra.mxu0 0.0
        %363 = vmatprep.subr.mxu0 0.0
        %364 = vmatpush1.msra.mxu0 0.0
        %365 = vmatprep.subr.mxu0 0.0
        %366 = vmatpush1.msra.mxu0 0.0
        %367 = vmatprep.subr.mxu0 0.0
        %368 = vmatpush1.msra.mxu0 0.0
        %369 = vmatprep.subr.mxu0 0.0
        %370 = vmatpush1.msra.mxu0 0.0
        %371 = vmatprep.subr.mxu0 0.0
        %372 = vmatpush1.msra.mxu0 0.0
        %373 = vmatprep.subr.mxu0 0.0
        %374 = vmatpush1.msra.mxu0 0.0
        %375 = vmatprep.subr.mxu0 0.0
        %376 = vmatpush1.msra.mxu0 0.0
        %377 = vmatprep.subr.mxu0 0.0
        %378 = vmatpush1.msra.mxu0 0.0
        %379 = vmatprep.subr.mxu0 0.0
        %380 = vmatpush1.msra.mxu0 0.0
        %381 = vmatprep.subr.mxu0 0.0
        %382 = vmatpush1.msra.mxu0 0.0
        %383 = vmatprep.subr.mxu0 0.0
        %384 = vmatpush1.msra.mxu0 0.0
        %385 = vmatprep.subr.mxu0 0.0
        %386 = vmatpush1.msra.mxu0 0.0
        %387 = vmatprep.subr.mxu0 0.0
        %388 = vmatpush1.msra.mxu0 0.0
        %389 = vmatprep.subr.mxu0 0.0
        %390 = vmatpush1.msra.mxu0 0.0
        %391 = vmatprep.subr.mxu0 0.0
        %392 = vmatpush1.msra.mxu0 0.0
        %393 = vmatprep.mubr.f32.mxu0 0.0
        %394 = vmatmul.mubr.f32.gmra.mrb[0].mxu0 %v327
        %v395 = vpop.f32.mrb[0].mxu0
        %v396 = vadd.f32 0.0, %v395
        %v397 = vpop.f32.mrb[0].mxu0
        %398 = vdwg.mxu0
        %v399 = vxor.u32 %v396, 2147483648
        %v400 = vmul.f32 %v399, 1.442695
        %v401 = vpow.pop %v400
        %v402 = vadd.f32 %v401, 1.0
        %v403 = vrcp.pop %v402
        %v404 = vmul.f32 1.0, %v403
        %s405 = sld [smem:[#allocation3]]
        %v406 = vstv %s405
        %vm407 = vcmp.ge.f32.partialorder %v404, %v406
        %v408 = vsel %vm407, 1, 0
        %v409 = vcvt.s32.f32 %v408
        %v410 = vlaneseq
        %v411 = vshrl.u32 %v410, 7
        %v412 = vsub.s32 0, %v411
        %v413 = vrot.slane %v409, %v412
        %415 = vbcast.lane.b32.xlu0 %v413, 256
        %v416 = vpop.permute.xlu0 %415
        %s418 = sor.u32 256, 8
        %419 = vbcast.lane.b32.xlu0 %v413, %s418
        %v420 = vpop.permute.xlu0 %419
        %s422 = sor.u32 256, 16
        %423 = vbcast.lane.b32.xlu0 %v413, %s422
        %v424 = vpop.permute.xlu0 %423
        %s426 = sor.u32 256, 24
        %427 = vbcast.lane.b32.xlu0 %v413, %s426
        %v428 = vpop.permute.xlu0 %427
        %v429 = vmul.f32 %v191, %v416
        %v430 = vmul.f32 %v192, %v416
        %v431 = vmul.f32 %v193, %v420
        %v432 = vmul.f32 %v194, %v420
        %v433 = vmul.f32 %v195, %v424
        %v434 = vmul.f32 %v196, %v424
        %v435 = vmul.f32 %v197, %v428
        %v436 = vmul.f32 %v198, %v428
        %437 = vst [vmem:[%s190] sm:$0xff] %v429
        %438 = vst [vmem:[%s190 + $0x8] sm:$0xff] %v430
        %439 = vst [vmem:[%s190 + $0x10] sm:$0xff] %v431
        %440 = vst [vmem:[%s190 + $0x18] sm:$0xff] %v432
        %441 = vst [vmem:[%s190 + $0x20] sm:$0xff] %v433
        %442 = vst [vmem:[%s190 + $0x28] sm:$0xff] %v434
        %443 = vst [vmem:[%s190 + $0x30] sm:$0xff] %v435
        %444 = vst [vmem:[%s190 + $0x38] sm:$0xff] %v436
        %s445 = sand.u32 %s98, 1
        %s446 = scalar_lea.sflag [#allocation6], %s445
        %s447 = sand.u32 %s98, 1
        %s448 = smul.addr %s447, 64
        %s449 = scalar_lea.vmem [#allocation7], %s448
        // Predicated region
        $region37: #{tpu_custom_call.1} parent=31 // pred_check
          %p450 = pneg %p108
        $region38: #{tpu_custom_call.1} parent=31 // pred_check_branch
          %452 = sbr.rel (%p450) target = $region40
        $region39: #{tpu_custom_call.1} parent=31 // pred_region
          %s454 = ssub.s32 1024, 1024
          %455 = vsyncadd %s446, %s454
          %s456 = smul.addr %s22, 8
          %s457 = smul.addr %s456, 128
          %s458 = scalar_lea.hbm %s4, %s457
          %s459 = sshll.u32 %s449, 4
          %s460 = int_to_ptr.vmem [resolvable:$true] %s459
          %465 = dma.vmem_to_hbm [thread:$0]  %s460, 1024, %s458, %s446, 256, 256, 16
        $region40: #{tpu_custom_call.1} parent=31 // pred_fallthru
          _
      $region32: #{tpu_custom_call.1} parent=5 // pred_fallthru
        _
      %p466 = scmp.le.s32.totalorder 2, %s17
      // Predicated region
      $region41: #{tpu_custom_call.1} parent=5 // pred_check
        %p467 = pneg %p466
      $region42: #{tpu_custom_call.1} parent=5 // pred_check_branch
        %469 = sbr.rel (%p467) target = $region44
      $region43: #{tpu_custom_call.1} parent=5 // pred_region
        %s470 = ssub.s32 %s17, 2
        // Predicated region
        $region45: #{tpu_custom_call.1} parent=43 // pred_check
          %p471 = pneg %p114
        $region46: #{tpu_custom_call.1} parent=43 // pred_check_branch
          %473 = sbr.rel (%p471) target = $region48
        $region47: #{tpu_custom_call.1} parent=43 // pred_region
          %s474 = sand.u32 %s99, 1
          %s475 = scalar_lea.sflag [#allocation6], %s474
          %s476 = sand.u32 %s99, 1
          %s477 = smul.addr %s476, 64
          %s478 = scalar_lea.vmem [#allocation7], %s477
          %479 = dma.done %s475, 1024
        $region48: #{tpu_custom_call.1} parent=43 // pred_fallthru
          _
      $region44: #{tpu_custom_call.1} parent=5 // pred_fallthru
        _
    $region6: #{tpu_custom_call.1} parent=1 // loop_footer
      %s21 = sadd.s32 1, %s17
    $region7: #{tpu_custom_call.1} parent=1 // loop_footer_branch
      %16 = sbr.rel target = $region3
    $region8: #{tpu_custom_call.1} parent=1 // loop_exit
      _
    %480 = vsyncpa [#allocation5], 1
    %s481 = scalar_lea.sflag [#allocation5], 1
    %482 = vsyncpa %s481, 1
    %483 = vsyncpa [#allocation6], 1
    %s484 = scalar_lea.sflag [#allocation6], 1
    %485 = vsyncpa %s484, 1

</llo_original>
